<compile_context>
chip_gen: v7x
topology: tpu7x:2x2x1
jax: 0.10.0
libtpu: 0.0.40
codegen_flags: <defaults>
</compile_context>

<pallas_src>
import functools

import jax
import jax.numpy as jnp
import numpy as np
from jax import lax
from jax.experimental import pallas as pl
from jax.experimental.pallas import tpu as pltpu


def _hidistance_xent_kernel(feat_ref,      # VMEM (B, tk) f32   feature chunk
                            bin_col_ref,   # VMEM (B, 1) f32    y_bin_batch[:, 1]
                            bin_row_ref,   # VMEM (1, B) f32    same, lane-dense
                            lab_col_ref,   # VMEM (B, 1) f32    family labels
                            lab_row_ref,   # VMEM (1, B) f32    same, lane-dense
                            pred_ref,      # VMEM (B, 1) f32    y_bin_pred[:, 1]
                            loss_ref,      # SMEM (1, 1)
                            supcon_ref,    # SMEM (1, 1)
                            xent_ref,      # SMEM (1, 1)
                            gram_acc,      # VMEM (B, B) f32 scratch
                            sq_acc,        # VMEM (B, 1) f32 scratch
                            *, margin, xent_lambda, batch_size):
    k = pl.program_id(0)

    @pl.when(k == 0)
    def _():
        gram_acc[...] = jnp.zeros_like(gram_acc)
        sq_acc[...] = jnp.zeros_like(sq_acc)

    # ---- accumulate Gram matrix + per-row sum of squares over D chunks -----
    x = feat_ref[...]                                             # [B, tk]
    gram_acc[...] += lax.dot_general(
        x, x, dimension_numbers=(((1,), (1,)), ((), ())),         # x @ x.T (trans_b)
        preferred_element_type=jnp.float32)
    sq_acc[...] += jnp.sum(x * x, axis=1, keepdims=True)          # [B, 1]

    # ---- epilogue: masks (fused), distance reductions, BCE -----------------
    @pl.when(k == pl.num_programs(0) - 1)
    def _():
        Bf = jnp.float32(batch_size)
        b = bin_col_ref[...]                                      # [B, 1] in {0,1}
        b_row = bin_row_ref[...]                                  # [1, B]
        lab_c = lab_col_ref[...]                                  # [B, 1]
        lab_r = lab_row_ref[...]                                  # [1, B]
        p = pred_ref[...]                                         # [B, 1]

        sq = sq_acc[...]                                          # [B, 1]
        dist = jnp.maximum(jnp.float32(1e-10),
                           sq + jnp.transpose(sq) - 2.0 * gram_acc[...])

        # Row reductions of dist (fused masks -- only eq_lab is a real [B,B] mask).
        S_all = jnp.sum(dist, axis=1, keepdims=True)              # sum_j d_ij
        S_b = jnp.sum(dist * b_row, axis=1, keepdims=True)        # sum_{j mal} d_ij

        eq_lab = (lab_c == lab_r).astype(jnp.float32)             # [B, B]
        S_lab = jnp.sum(eq_lab * dist, axis=1, keepdims=True)
        cnt_lab = jnp.sum(eq_lab, axis=1, keepdims=True)          # incl. diagonal

        nb = jnp.sum(b)                                           # # malicious
        ben = 1.0 - b                                             # benign indicator
        # rowsum(binary_mask * dist) / counts (diagonal included, as in module)
        S_bin = b * S_b + ben * (S_all - S_b)
        cnt_bin = b * nb + ben * (Bf - nb)
        # rowsum(same_ben_mask * dist)  (ben outer product)
        S_ben = ben * (S_all - S_b)

        # diagonal-corrected counts
        same_ben_cnt = ben * (Bf - nb - 1.0)
        other_mal_cnt = cnt_bin - cnt_lab                         # diag cancels exactly
        same_mal_fam_cnt = (cnt_lab - 1.0) - same_ben_cnt
        bin_neg_cnt = Bf - cnt_bin

        # masked distance sums (other_mal / bin_neg are exact; same_ben /
        # same_mal_fam keep a ~1e-10-scale self-distance term, below tolerance)
        sum_same_ben = jnp.maximum(S_ben - same_ben_cnt * margin, 0.0)
        sum_other_mal = jnp.maximum((S_bin - S_lab) - other_mal_cnt * margin, 0.0)
        sum_same_mal_fam = S_lab - S_ben
        sum_bin_neg = jnp.maximum(bin_neg_cnt * (2.0 * margin) - (S_all - S_bin), 0.0)

        per_sample = (sum_same_ben / jnp.maximum(same_ben_cnt, 1.0)
                      + sum_other_mal / jnp.maximum(other_mal_cnt, 1.0)
                      + sum_same_mal_fam / jnp.maximum(same_mal_fam_cnt, 1.0)
                      + sum_bin_neg / jnp.maximum(bin_neg_cnt, 1.0))
        supcon = jnp.sum(per_sample) / Bf                         # reduce='mean'

        # binary cross entropy (reduction='mean', weight=None), PyTorch log clamp
        log_p = jnp.maximum(jnp.log(p), -100.0)
        log_1mp = jnp.maximum(jnp.log(1.0 - p), -100.0)
        xent = -jnp.sum(b * log_p + (1.0 - b) * log_1mp) / Bf

        loss_ref[0, 0] = supcon + xent_lambda * xent
        supcon_ref[0, 0] = supcon
        xent_ref[0, 0] = xent


def hidistance_xent_loss(xent_lambda, y_bin_pred, y_bin_batch, features, labels,
                         margin=10.0):
    """Returns (loss, supcon_loss, xent_bin_loss) -- matches the PyTorch module
    with reduce='mean', sample_reduce='mean', family_info=True, weight=None,
    split=None."""
    B, D = features.shape

    # Choose the D-chunk size (lane-aligned); pad D with zeros (harmless for
    # Gram / sum-of-squares).
    if D <= 1024:
        tk = ((D + 127) // 128) * 128
    else:
        tk = 512
    D_pad = ((D + tk - 1) // tk) * tk
    num_k = D_pad // tk

    feats = features.astype(jnp.float32)
    if D_pad != D:
        feats = jnp.pad(feats, ((0, 0), (0, D_pad - D)))

    bin_col = y_bin_batch[:, 1:2].astype(jnp.float32)             # [B, 1]
    bin_row = bin_col.reshape(1, B)                               # [1, B]
    lab_col = labels.reshape(B, 1).astype(jnp.float32)            # [B, 1]
    lab_row = lab_col.reshape(1, B)                               # [1, B]
    pred_col = y_bin_pred[:, 1:2].astype(jnp.float32)             # [B, 1]

    kernel = functools.partial(_hidistance_xent_kernel,
                               margin=float(margin),
                               xent_lambda=float(xent_lambda),
                               batch_size=B)

    # Explicit VMEM budget: 2x double-buffered feature tiles + B x B working
    # set (gram/dist/eq_lab + temporaries), with headroom, capped below v7x's
    # 64 MiB physical VMEM.
    bb = max(B, 8) * max(B, 128) * 4
    vmem_bytes = int(min(60 * 2**20,
                         max(8 * 2**20, 2 * (2 * B * tk * 4 + 10 * bb))))

    out_shape = tuple(jax.ShapeDtypeStruct((1, 1), jnp.float32) for _ in range(3))
    grid_spec = pltpu.PrefetchScalarGridSpec(
        num_scalar_prefetch=0,
        grid=(num_k,),
        in_specs=[
            pl.BlockSpec((B, tk), lambda k: (0, k)),              # feature chunks
            pl.BlockSpec((B, 1), lambda k: (0, 0)),               # bin col
            pl.BlockSpec((1, B), lambda k: (0, 0)),               # bin row
            pl.BlockSpec((B, 1), lambda k: (0, 0)),               # lab col
            pl.BlockSpec((1, B), lambda k: (0, 0)),               # lab row
            pl.BlockSpec((B, 1), lambda k: (0, 0)),               # predictions
        ],
        out_specs=tuple(
            pl.BlockSpec((1, 1), lambda k: (0, 0),
                         memory_space=pltpu.MemorySpace.SMEM)
            for _ in range(3)),
        scratch_shapes=[pltpu.VMEM((B, B), jnp.float32),          # Gram accumulator
                        pltpu.VMEM((B, 1), jnp.float32)],         # sum-of-squares acc
    )

    loss, supcon, xent = pl.pallas_call(
        kernel,
        out_shape=out_shape,
        grid_spec=grid_spec,
        compiler_params=pltpu.CompilerParams(
            dimension_semantics=("arbitrary",),
            vmem_limit_bytes=vmem_bytes),
    )(feats, bin_col, bin_row, lab_col, lab_row, pred_col)
    return loss[0, 0], supcon[0, 0], xent[0, 0]


# ------------------------- pure-JAX reference ------------------------------
def _reference(xent_lambda, y_bin_pred, y_bin_batch, features, labels, margin=10.0):
    x = features.astype(jnp.float32)
    b = y_bin_batch[:, 1:2].astype(jnp.float32)
    lab = labels.reshape(-1, 1).astype(jnp.float32)
    B = x.shape[0]
    binary_mask = (b == b.T).astype(jnp.float32)
    multi_mask = (lab == lab.T).astype(jnp.float32)
    other_mal = binary_mask - multi_mask
    ben = (b == 0.0).astype(jnp.float32)
    same_ben = ben @ ben.T
    same_mal_fam = multi_mask - same_ben
    bin_neg = 1.0 - binary_mask
    diag = 1.0 - jnp.eye(B, dtype=jnp.float32)
    other_mal, same_ben, same_mal_fam = other_mal * diag, same_ben * diag, same_mal_fam * diag
    sq = jnp.sum(x * x, axis=1, keepdims=True)
    dist = jnp.maximum(1e-10, sq + sq.T - 2.0 * (x @ x.T))
    rs = lambda m: jnp.sum(m, axis=1)
    s_ben = jnp.maximum(rs(same_ben * dist) - rs(same_ben) * margin, 0.0)
    s_oth = jnp.maximum(rs(other_mal * dist) - rs(other_mal) * margin, 0.0)
    s_fam = rs(same_mal_fam * dist)
    s_neg = jnp.maximum(rs(bin_neg) * 2.0 * margin - rs(bin_neg * dist), 0.0)
    supcon = jnp.mean(s_ben / jnp.maximum(rs(same_ben), 1.0)
                      + s_oth / jnp.maximum(rs(other_mal), 1.0)
                      + s_fam / jnp.maximum(rs(same_mal_fam), 1.0)
                      + s_neg / jnp.maximum(rs(bin_neg), 1.0))
    p = y_bin_pred[:, 1].astype(jnp.float32)
    t = b[:, 0]
    xent = -jnp.mean(t * jnp.maximum(jnp.log(p), -100.0)
                     + (1.0 - t) * jnp.maximum(jnp.log(1.0 - p), -100.0))
    return supcon + xent_lambda * xent, supcon, xent


if __name__ == "__main__":
    B, D = 8, 128
    key = jax.random.PRNGKey(0)
    k_feat, k_lab, k_pred = jax.random.split(key, 3)

    features = jax.random.normal(k_feat, (B, D), dtype=jnp.float32)
    labels = jax.random.randint(k_lab, (B,), 0, 4)                 # 0 == benign family
    bin_lab = (labels > 0).astype(jnp.float32)                     # binary label
    y_bin_batch = jnp.stack([1.0 - bin_lab, bin_lab], axis=1)      # one-hot [B, 2]
    probs = jax.nn.sigmoid(jax.random.normal(k_pred, (B,), dtype=jnp.float32))
    y_bin_pred = jnp.stack([1.0 - probs, probs], axis=1)           # [B, 2]
    xent_lambda = 100.0
    margin = 10.0

    loss, supcon, xent = hidistance_xent_loss(
        xent_lambda, y_bin_pred, y_bin_batch, features, labels, margin=margin)
    jax.block_until_ready((loss, supcon, xent))

    ref_loss, ref_supcon, ref_xent = _reference(
        xent_lambda, y_bin_pred, y_bin_batch, features, labels, margin=margin)

    np.testing.assert_allclose(np.asarray(loss), np.asarray(ref_loss), rtol=1e-4, atol=1e-4)
    np.testing.assert_allclose(np.asarray(supcon), np.asarray(ref_supcon), rtol=1e-4, atol=1e-4)
    np.testing.assert_allclose(np.asarray(xent), np.asarray(ref_xent), rtol=1e-4, atol=1e-4)

    print("KERNEL_OK")
</pallas_src>

<mosaic_0001>
module attributes {stable_mosaic.version = 11 : i64} {
  func.func @_hidistance_xent_kernel(%arg0: i32, %arg1: memref<8x128xf32, #tpu.memory_space<vmem>>, %arg2: memref<8x1xf32, #tpu.memory_space<vmem>>, %arg3: memref<1x8xf32, #tpu.memory_space<vmem>>, %arg4: memref<8x1xf32, #tpu.memory_space<vmem>>, %arg5: memref<1x8xf32, #tpu.memory_space<vmem>>, %arg6: memref<8x1xf32, #tpu.memory_space<vmem>>, %arg7: memref<1x1xf32, #tpu.memory_space<smem>>, %arg8: memref<1x1xf32, #tpu.memory_space<smem>>, %arg9: memref<1x1xf32, #tpu.memory_space<smem>>, %arg10: memref<8x8xf32, #tpu.memory_space<vmem>>, %arg11: memref<8x1xf32, #tpu.memory_space<vmem>>) attributes {dimension_semantics = [#tpu.dimension_semantics<arbitrary>], iteration_bounds = array<i64: 1>, scalar_prefetch = 0 : i64, scratch_operands = 2 : i64, tpu.core_type = #tpu.core_type<tc>, window_params = [{transform_indices = @transform_0, window_bounds = array<i64: 8, 128>}, {pipeline_mode = #tpu.pipeline_mode<synchronous>, transform_indices = @transform_1, window_bounds = array<i64: 8, 1>}, {pipeline_mode = #tpu.pipeline_mode<synchronous>, transform_indices = @transform_2, window_bounds = array<i64: 1, 8>}, {pipeline_mode = #tpu.pipeline_mode<synchronous>, transform_indices = @transform_3, window_bounds = array<i64: 8, 1>}, {pipeline_mode = #tpu.pipeline_mode<synchronous>, transform_indices = @transform_4, window_bounds = array<i64: 1, 8>}, {pipeline_mode = #tpu.pipeline_mode<synchronous>, transform_indices = @transform_5, window_bounds = array<i64: 8, 1>}, {transform_indices = @transform_6, window_bounds = array<i64: 1, 1>}, {transform_indices = @transform_7, window_bounds = array<i64: 1, 1>}, {transform_indices = @transform_8, window_bounds = array<i64: 1, 1>}]} {
    %c0_i32 = arith.constant 0 : i32
    %0 = arith.cmpi eq, %arg0, %c0_i32 : i32
    %1 = arith.extui %0 : i1 to i32
    %c0_i32_0 = arith.constant 0 : i32
    %2 = arith.cmpi ne, %1, %c0_i32_0 : i32
    scf.if %2 {
      %cst_13 = arith.constant 0.000000e+00 : f32
      %17 = vector.broadcast %cst_13 : f32 to vector<8x8xf32>
      %c0_14 = arith.constant 0 : index
      %c0_15 = arith.constant 0 : index
      %18 = vector.load %arg10[%c0_14, %c0_15] : memref<8x8xf32, #tpu.memory_space<vmem>>, vector<8x8xf32>
      tpu.vector_store %arg10[%c0_14, %c0_15], %17 {strides = array<i32>} : memref<8x8xf32, #tpu.memory_space<vmem>>, vector<8x8xf32>,
      %cst_16 = arith.constant 0.000000e+00 : f32
      %19 = vector.broadcast %cst_16 : f32 to vector<8x1xf32>
      %c0_17 = arith.constant 0 : index
      %c0_18 = arith.constant 0 : index
      %20 = vector.load %arg11[%c0_17, %c0_18] : memref<8x1xf32, #tpu.memory_space<vmem>>, vector<8x1xf32>
      tpu.vector_store %arg11[%c0_17, %c0_18], %19 {strides = array<i32>} : memref<8x1xf32, #tpu.memory_space<vmem>>, vector<8x1xf32>,
    } else {
    }
    %c0 = arith.constant 0 : index
    %c0_1 = arith.constant 0 : index
    %3 = vector.load %arg1[%c0, %c0_1] : memref<8x128xf32, #tpu.memory_space<vmem>>, vector<8x128xf32>
    %c0_2 = arith.constant 0 : index
    %c0_3 = arith.constant 0 : index
    %4 = vector.load %arg10[%c0_2, %c0_3] : memref<8x8xf32, #tpu.memory_space<vmem>>, vector<8x8xf32>
    %cst = arith.constant dense<0.000000e+00> : vector<8x8xf32>
    %5 = tpu.matmul %3, %3, %cst {dimension_numbers = #tpu.dot_dimension_numbers<[1], [1], [0], [0], [0, 0, 1, 0], [], []>} : vector<8x128xf32>, vector<8x128xf32>, vector<8x8xf32> -> vector<8x8xf32>
    %6 = arith.addf %4, %5 : vector<8x8xf32>
    %c0_4 = arith.constant 0 : index
    %c0_5 = arith.constant 0 : index
    %7 = vector.load %arg10[%c0_4, %c0_5] : memref<8x8xf32, #tpu.memory_space<vmem>>, vector<8x8xf32>
    tpu.vector_store %arg10[%c0_4, %c0_5], %6 {strides = array<i32>} : memref<8x8xf32, #tpu.memory_space<vmem>>, vector<8x8xf32>,
    %c0_6 = arith.constant 0 : index
    %c0_7 = arith.constant 0 : index
    %8 = vector.load %arg11[%c0_6, %c0_7] : memref<8x1xf32, #tpu.memory_space<vmem>>, vector<8x1xf32>
    %9 = arith.mulf %3, %3 : vector<8x128xf32>
    %cst_8 = arith.constant dense<0.000000e+00> : vector<8xf32>
    %10 = vector.multi_reduction <add>, %9, %cst_8 [1] : vector<8x128xf32> to vector<8xf32>
    %11 = vector.shape_cast %10 : vector<8xf32> to vector<8x1xf32>
    %12 = arith.addf %8, %11 : vector<8x1xf32>
    %c0_9 = arith.constant 0 : index
    %c0_10 = arith.constant 0 : index
    %13 = vector.load %arg11[%c0_9, %c0_10] : memref<8x1xf32, #tpu.memory_space<vmem>>, vector<8x1xf32>
    tpu.vector_store %arg11[%c0_9, %c0_10], %12 {strides = array<i32>} : memref<8x1xf32, #tpu.memory_space<vmem>>, vector<8x1xf32>,
    %c0_i32_11 = arith.constant 0 : i32
    %14 = arith.cmpi eq, %arg0, %c0_i32_11 : i32
    %15 = arith.extui %14 : i1 to i32
    %c0_i32_12 = arith.constant 0 : i32
    %16 = arith.cmpi ne, %15, %c0_i32_12 : i32
    scf.if %16 {
      %c0_13 = arith.constant 0 : index
      %c0_14 = arith.constant 0 : index
      %17 = vector.load %arg2[%c0_13, %c0_14] : memref<8x1xf32, #tpu.memory_space<vmem>>, vector<8x1xf32>
      %c0_15 = arith.constant 0 : index
      %c0_16 = arith.constant 0 : index
      %18 = vector.load %arg3[%c0_15, %c0_16] : memref<1x8xf32, #tpu.memory_space<vmem>>, vector<1x8xf32>
      %c0_17 = arith.constant 0 : index
      %c0_18 = arith.constant 0 : index
      %19 = vector.load %arg4[%c0_17, %c0_18] : memref<8x1xf32, #tpu.memory_space<vmem>>, vector<8x1xf32>
      %c0_19 = arith.constant 0 : index
      %c0_20 = arith.constant 0 : index
      %20 = vector.load %arg5[%c0_19, %c0_20] : memref<1x8xf32, #tpu.memory_space<vmem>>, vector<1x8xf32>
      %c0_21 = arith.constant 0 : index
      %c0_22 = arith.constant 0 : index
      %21 = vector.load %arg6[%c0_21, %c0_22] : memref<8x1xf32, #tpu.memory_space<vmem>>, vector<8x1xf32>
      %c0_23 = arith.constant 0 : index
      %c0_24 = arith.constant 0 : index
      %22 = vector.load %arg11[%c0_23, %c0_24] : memref<8x1xf32, #tpu.memory_space<vmem>>, vector<8x1xf32>
      %23 = tpu.transpose %22, [1, 0] : vector<8x1xf32> -> vector<1x8xf32>
      %24 = vector.broadcast %22 : vector<8x1xf32> to vector<8x8xf32>
      %25 = vector.broadcast %23 : vector<1x8xf32> to vector<8x8xf32>
      %26 = arith.addf %24, %25 : vector<8x8xf32>
      %c0_25 = arith.constant 0 : index
      %c0_26 = arith.constant 0 : index
      %27 = vector.load %arg10[%c0_25, %c0_26] : memref<8x8xf32, #tpu.memory_space<vmem>>, vector<8x8xf32>
      %cst_27 = arith.constant 2.000000e+00 : f32
      %28 = vector.broadcast %cst_27 : f32 to vector<8x8xf32>
      %29 = arith.mulf %28, %27 : vector<8x8xf32>
      %30 = arith.subf %26, %29 : vector<8x8xf32>
      %cst_28 = arith.constant 1.000000e-10 : f32
      %31 = vector.broadcast %cst_28 : f32 to vector<8x8xf32>
      %32 = arith.maximumf %31, %30 : vector<8x8xf32>
      %cst_29 = arith.constant dense<0.000000e+00> : vector<8xf32>
      %33 = vector.multi_reduction <add>, %32, %cst_29 [1] : vector<8x8xf32> to vector<8xf32>
      %34 = vector.shape_cast %33 : vector<8xf32> to vector<8x1xf32>
      %35 = vector.broadcast %18 : vector<1x8xf32> to vector<8x8xf32>
      %36 = arith.mulf %32, %35 : vector<8x8xf32>
      %cst_30 = arith.constant dense<0.000000e+00> : vector<8xf32>
      %37 = vector.multi_reduction <add>, %36, %cst_30 [1] : vector<8x8xf32> to vector<8xf32>
      %38 = vector.shape_cast %37 : vector<8xf32> to vector<8x1xf32>
      %39 = vector.broadcast %19 : vector<8x1xf32> to vector<8x8xf32>
      %40 = vector.broadcast %20 : vector<1x8xf32> to vector<8x8xf32>
      %41 = arith.cmpf oeq, %39, %40 : vector<8x8xf32>
      %42 = arith.extui %41 : vector<8x8xi1> to vector<8x8xi32>
      %43 = arith.sitofp %42 : vector<8x8xi32> to vector<8x8xf32>
      %44 = arith.mulf %43, %32 : vector<8x8xf32>
      %cst_31 = arith.constant dense<0.000000e+00> : vector<8xf32>
      %45 = vector.multi_reduction <add>, %44, %cst_31 [1] : vector<8x8xf32> to vector<8xf32>
      %46 = vector.shape_cast %45 : vector<8xf32> to vector<8x1xf32>
      %cst_32 = arith.constant dense<0.000000e+00> : vector<8xf32>
      %47 = vector.multi_reduction <add>, %43, %cst_32 [1] : vector<8x8xf32> to vector<8xf32>
      %48 = vector.shape_cast %47 : vector<8xf32> to vector<8x1xf32>
      %49 = vector.shape_cast %17 : vector<8x1xf32> to vector<1x8x1xf32>
      %cst_33 = arith.constant dense<0.000000e+00> : vector<1xf32>
      %50 = vector.multi_reduction <add>, %49, %cst_33 [1, 2] : vector<1x8x1xf32> to vector<1xf32>
      %51 = vector.shape_cast %50 : vector<1xf32> to vector<1x1x1xf32>
      %52 = vector.extract %51[0, 0, 0] : f32 from vector<1x1x1xf32>
      %cst_34 = arith.constant 1.000000e+00 : f32
      %53 = vector.broadcast %cst_34 : f32 to vector<8x1xf32>
      %54 = arith.subf %53, %17 : vector<8x1xf32>
      %55 = arith.mulf %17, %38 : vector<8x1xf32>
      %56 = arith.subf %34, %38 : vector<8x1xf32>
      %57 = arith.mulf %54, %56 : vector<8x1xf32>
      %58 = arith.addf %55, %57 : vector<8x1xf32>
      %59 = vector.broadcast %52 : f32 to vector<8x1xf32>
      %60 = arith.mulf %17, %59 : vector<8x1xf32>
      %cst_35 = arith.constant 8.000000e+00 : f32
      %61 = arith.subf %cst_35, %52 : f32
      %62 = vector.broadcast %61 : f32 to vector<8x1xf32>
      %63 = arith.mulf %54, %62 : vector<8x1xf32>
      %64 = arith.addf %60, %63 : vector<8x1xf32>
      %65 = arith.subf %34, %38 : vector<8x1xf32>
      %66 = arith.mulf %54, %65 : vector<8x1xf32>
      %cst_36 = arith.constant 8.000000e+00 : f32
      %67 = arith.subf %cst_36, %52 : f32
      %cst_37 = arith.constant 1.000000e+00 : f32
      %68 = arith.subf %67, %cst_37 : f32
      %69 = vector.broadcast %68 : f32 to vector<8x1xf32>
      %70 = arith.mulf %54, %69 : vector<8x1xf32>
      %71 = arith.subf %64, %48 : vector<8x1xf32>
      %cst_38 = arith.constant 1.000000e+00 : f32
      %72 = vector.broadcast %cst_38 : f32 to vector<8x1xf32>
      %73 = arith.subf %48, %72 : vector<8x1xf32>
      %74 = arith.subf %73, %70 : vector<8x1xf32>
      %cst_39 = arith.constant 8.000000e+00 : f32
      %75 = vector.broadcast %cst_39 : f32 to vector<8x1xf32>
      %76 = arith.subf %75, %64 : vector<8x1xf32>
      %cst_40 = arith.constant 1.000000e+01 : f32
      %77 = vector.broadcast %cst_40 : f32 to vector<8x1xf32>
      %78 = arith.mulf %70, %77 : vector<8x1xf32>
      %79 = arith.subf %66, %78 : vector<8x1xf32>
      %cst_41 = arith.constant 0.000000e+00 : f32
      %80 = vector.broadcast %cst_41 : f32 to vector<8x1xf32>
      %81 = arith.maximumf %79, %80 : vector<8x1xf32>
      %82 = arith.subf %58, %46 : vector<8x1xf32>
      %cst_42 = arith.constant 1.000000e+01 : f32
      %83 = vector.broadcast %cst_42 : f32 to vector<8x1xf32>
      %84 = arith.mulf %71, %83 : vector<8x1xf32>
      %85 = arith.subf %82, %84 : vector<8x1xf32>
      %cst_43 = arith.constant 0.000000e+00 : f32
      %86 = vector.broadcast %cst_43 : f32 to vector<8x1xf32>
      %87 = arith.maximumf %85, %86 : vector<8x1xf32>
      %88 = arith.subf %46, %66 : vector<8x1xf32>
      %cst_44 = arith.constant 2.000000e+01 : f32
      %89 = vector.broadcast %cst_44 : f32 to vector<8x1xf32>
      %90 = arith.mulf %76, %89 : vector<8x1xf32>
      %91 = arith.subf %34, %58 : vector<8x1xf32>
      %92 = arith.subf %90, %91 : vector<8x1xf32>
      %cst_45 = arith.constant 0.000000e+00 : f32
      %93 = vector.broadcast %cst_45 : f32 to vector<8x1xf32>
      %94 = arith.maximumf %92, %93 : vector<8x1xf32>
      %cst_46 = arith.constant 1.000000e+00 : f32
      %95 = vector.broadcast %cst_46 : f32 to vector<8x1xf32>
      %96 = arith.maximumf %70, %95 : vector<8x1xf32>
      %97 = arith.divf %81, %96 : vector<8x1xf32>
      %cst_47 = arith.constant 1.000000e+00 : f32
      %98 = vector.broadcast %cst_47 : f32 to vector<8x1xf32>
      %99 = arith.maximumf %71, %98 : vector<8x1xf32>
      %100 = arith.divf %87, %99 : vector<8x1xf32>
      %101 = arith.addf %97, %100 : vector<8x1xf32>
      %cst_48 = arith.constant 1.000000e+00 : f32
      %102 = vector.broadcast %cst_48 : f32 to vector<8x1xf32>
      %103 = arith.maximumf %74, %102 : vector<8x1xf32>
      %104 = arith.divf %88, %103 : vector<8x1xf32>
      %105 = arith.addf %101, %104 : vector<8x1xf32>
      %cst_49 = arith.constant 1.000000e+00 : f32
      %106 = vector.broadcast %cst_49 : f32 to vector<8x1xf32>
      %107 = arith.maximumf %76, %106 : vector<8x1xf32>
      %108 = arith.divf %94, %107 : vector<8x1xf32>
      %109 = arith.addf %105, %108 : vector<8x1xf32>
      %110 = vector.shape_cast %109 : vector<8x1xf32> to vector<1x8x1xf32>
      %cst_50 = arith.constant dense<0.000000e+00> : vector<1xf32>
      %111 = vector.multi_reduction <add>, %110, %cst_50 [1, 2] : vector<1x8x1xf32> to vector<1xf32>
      %112 = vector.shape_cast %111 : vector<1xf32> to vector<1x1x1xf32>
      %113 = vector.extract %112[0, 0, 0] : f32 from vector<1x1x1xf32>
      %cst_51 = arith.constant 8.000000e+00 : f32
      %114 = arith.divf %113, %cst_51 : f32
      %115 = math.log %21 : vector<8x1xf32>
      %cst_52 = arith.constant -1.000000e+02 : f32
      %116 = vector.broadcast %cst_52 : f32 to vector<8x1xf32>
      %117 = arith.maximumf %115, %116 : vector<8x1xf32>
      %cst_53 = arith.constant 1.000000e+00 : f32
      %118 = vector.broadcast %cst_53 : f32 to vector<8x1xf32>
      %119 = arith.subf %118, %21 : vector<8x1xf32>
      %120 = math.log %119 : vector<8x1xf32>
      %cst_54 = arith.constant -1.000000e+02 : f32
      %121 = vector.broadcast %cst_54 : f32 to vector<8x1xf32>
      %122 = arith.maximumf %120, %121 : vector<8x1xf32>
      %123 = arith.mulf %17, %117 : vector<8x1xf32>
      %cst_55 = arith.constant 1.000000e+00 : f32
      %124 = vector.broadcast %cst_55 : f32 to vector<8x1xf32>
      %125 = arith.subf %124, %17 : vector<8x1xf32>
      %126 = arith.mulf %125, %122 : vector<8x1xf32>
      %127 = arith.addf %123, %126 : vector<8x1xf32>
      %128 = vector.shape_cast %127 : vector<8x1xf32> to vector<1x8x1xf32>
      %cst_56 = arith.constant dense<0.000000e+00> : vector<1xf32>
      %129 = vector.multi_reduction <add>, %128, %cst_56 [1, 2] : vector<1x8x1xf32> to vector<1xf32>
      %130 = vector.shape_cast %129 : vector<1xf32> to vector<1x1x1xf32>
      %131 = vector.extract %130[0, 0, 0] : f32 from vector<1x1x1xf32>
      %cst_57 = arith.constant 0.000000e+00 : f32
      %132 = arith.subf %cst_57, %131 : f32
      %cst_58 = arith.constant 8.000000e+00 : f32
      %133 = arith.divf %132, %cst_58 : f32
      %cst_59 = arith.constant 1.000000e+02 : f32
      %134 = arith.mulf %cst_59, %133 : f32
      %135 = arith.addf %114, %134 : f32
      %c0_60 = arith.constant 0 : index
      %c0_61 = arith.constant 0 : index
      %136 = memref.load %arg7[%c0_60, %c0_61] : memref<1x1xf32, #tpu.memory_space<smem>>
      memref.store %135, %arg7[%c0_60, %c0_61] : memref<1x1xf32, #tpu.memory_space<smem>>
      %c0_62 = arith.constant 0 : index
      %c0_63 = arith.constant 0 : index
      %137 = memref.load %arg8[%c0_62, %c0_63] : memref<1x1xf32, #tpu.memory_space<smem>>
      memref.store %114, %arg8[%c0_62, %c0_63] : memref<1x1xf32, #tpu.memory_space<smem>>
      %c0_64 = arith.constant 0 : index
      %c0_65 = arith.constant 0 : index
      %138 = memref.load %arg9[%c0_64, %c0_65] : memref<1x1xf32, #tpu.memory_space<smem>>
      memref.store %133, %arg9[%c0_64, %c0_65] : memref<1x1xf32, #tpu.memory_space<smem>>
    } else {
    }
    return
  }
  func.func @transform_0(%arg0: i32) -> (i32, i32) {
    %c0_i32 = arith.constant 0 : i32
    %c0_i32_0 = arith.constant 0 : i32
    return %c0_i32, %arg0 : i32, i32
  }
  func.func @transform_1(%arg0: i32) -> (i32, i32) {
    %c0_i32 = arith.constant 0 : i32
    %c0_i32_0 = arith.constant 0 : i32
    %c0_i32_1 = arith.constant 0 : i32
    return %c0_i32, %c0_i32_0 : i32, i32
  }
  func.func @transform_2(%arg0: i32) -> (i32, i32) {
    %c0_i32 = arith.constant 0 : i32
    %c0_i32_0 = arith.constant 0 : i32
    %c0_i32_1 = arith.constant 0 : i32
    return %c0_i32, %c0_i32_0 : i32, i32
  }
  func.func @transform_3(%arg0: i32) -> (i32, i32) {
    %c0_i32 = arith.constant 0 : i32
    %c0_i32_0 = arith.constant 0 : i32
    %c0_i32_1 = arith.constant 0 : i32
    return %c0_i32, %c0_i32_0 : i32, i32
  }
  func.func @transform_4(%arg0: i32) -> (i32, i32) {
    %c0_i32 = arith.constant 0 : i32
    %c0_i32_0 = arith.constant 0 : i32
    %c0_i32_1 = arith.constant 0 : i32
    return %c0_i32, %c0_i32_0 : i32, i32
  }
  func.func @transform_5(%arg0: i32) -> (i32, i32) {
    %c0_i32 = arith.constant 0 : i32
    %c0_i32_0 = arith.constant 0 : i32
    %c0_i32_1 = arith.constant 0 : i32
    return %c0_i32, %c0_i32_0 : i32, i32
  }
  func.func @transform_6(%arg0: i32) -> (i32, i32) {
    %c0_i32 = arith.constant 0 : i32
    %c0_i32_0 = arith.constant 0 : i32
    %c0_i32_1 = arith.constant 0 : i32
    return %c0_i32, %c0_i32_0 : i32, i32
  }
  func.func @transform_7(%arg0: i32) -> (i32, i32) {
    %c0_i32 = arith.constant 0 : i32
    %c0_i32_0 = arith.constant 0 : i32
    %c0_i32_1 = arith.constant 0 : i32
    return %c0_i32, %c0_i32_0 : i32, i32
  }
  func.func @transform_8(%arg0: i32) -> (i32, i32) {
    %c0_i32 = arith.constant 0 : i32
    %c0_i32_0 = arith.constant 0 : i32
    %c0_i32_1 = arith.constant 0 : i32
    return %c0_i32, %c0_i32_0 : i32, i32
  }
}

</mosaic_0001>

<llo_original>
// kernel: tpu_custom_call.1
$region0: #{tpu_custom_call.1}
  #allocation0 [shape = 'u32[]', space=smem, size = 0x4, offset = 0x4, fixed_abs, tag = 'smem constant byte address 0x4 - core index']
  #allocation1 [shape = 'u32[144,128]{1,0:T(1,128)}', space=vmem, size = 0x12000, scoped, tag = 'internal scratch']
  #allocation2 [shape = 'f32[8,8]{1,0:T(8,128)}', space=vmem, size = 0x1000, scoped, tag = 'scratch operand']
  #allocation3 [shape = 'f32[8,1]{1,0:T(8,128)}', space=vmem, size = 0x1000, scoped, tag = 'scratch operand']
  %s0 = inlined_call_operand.vmem [shape: f32[8,128], index: 0, kind: input, shape index: {}]
  %s1 = inlined_call_operand.vmem [shape: f32[8,1], index: 1, kind: input, shape index: {}]
  %s2 = inlined_call_operand.vmem [shape: f32[1,8], index: 2, kind: input, shape index: {}]
  %s3 = inlined_call_operand.vmem [shape: f32[8,1], index: 3, kind: input, shape index: {}]
  %s4 = inlined_call_operand.vmem [shape: f32[1,8], index: 4, kind: input, shape index: {}]
  %s5 = inlined_call_operand.vmem [shape: f32[8,1], index: 5, kind: input, shape index: {}]
  %s6 = inlined_call_operand.hbm [shape: f32[1,1], index: 6, kind: output, shape index: {0}]
  %s7 = inlined_call_operand.hbm [shape: f32[1,1], index: 7, kind: output, shape index: {1}]
  %s8 = inlined_call_operand.hbm [shape: f32[1,1], index: 8, kind: output, shape index: {2}]
  %9 = xla_tuple %s6, %s7, %s8
  %s10 = sld [smem:[#allocation0]]
  $region58: #{tpu_custom_call.1} parent=0
    _
  %s12 = ssub.s32 1, %s10
  %s13 = scalar_select 0, %s12, %s10
  $region1: #{tpu_custom_call.1} parent=0
    #allocation4 [shape = 'u8[512]{0}', space=smem, size = 0x200, scoped, tag = 'output window, operand 0, single buffered']
    #allocation5 [shape = 's32[1]{0}', space=sflag, size = 0x4, scoped, tag = 'scoped memory for tpu_custom_call.1']
    #allocation6 [shape = 'u8[512]{0}', space=smem, size = 0x200, scoped, tag = 'output window, operand 1, single buffered']
    #allocation7 [shape = 's32[1]{0}', space=sflag, size = 0x4, scoped, tag = 'scoped memory for tpu_custom_call.1']
    #allocation8 [shape = 'u8[512]{0}', space=smem, size = 0x200, scoped, tag = 'output window, operand 2, single buffered']
    %14 = vsyncpa [#allocation5], 0
    %15 = vsyncpa [#allocation7], 0
    // Predicated region
    $region2: #{tpu_custom_call.1} parent=1 // pred_check
      _
    $region3: #{tpu_custom_call.1} parent=1 // pred_check_branch
      %17 = sbr.rel (0) target = $region5
    $region4: #{tpu_custom_call.1} parent=1 // pred_region
      _
    $region5: #{tpu_custom_call.1} parent=1 // pred_fallthru
      _
    // Predicated region
    $region6: #{tpu_custom_call.1} parent=1 // pred_check
      _
    $region7: #{tpu_custom_call.1} parent=1 // pred_check_branch
      %19 = sbr.rel (0) target = $region9
    $region8: #{tpu_custom_call.1} parent=1 // pred_region
      _
    $region9: #{tpu_custom_call.1} parent=1 // pred_fallthru
      _
    // Predicated region
    $region10: #{tpu_custom_call.1} parent=1 // pred_check
      _
    $region11: #{tpu_custom_call.1} parent=1 // pred_check_branch
      %21 = sbr.rel (0) target = $region13
    $region12: #{tpu_custom_call.1} parent=1 // pred_region
      _
    $region13: #{tpu_custom_call.1} parent=1 // pred_fallthru
      _
    // Predicated region
    $region14: #{tpu_custom_call.1} parent=1 // pred_check
      _
    $region15: #{tpu_custom_call.1} parent=1 // pred_check_branch
      %23 = sbr.rel (0) target = $region17
    $region16: #{tpu_custom_call.1} parent=1 // pred_region
      _
    $region17: #{tpu_custom_call.1} parent=1 // pred_fallthru
      _
    // Predicated region
    $region18: #{tpu_custom_call.1} parent=1 // pred_check
      _
    $region19: #{tpu_custom_call.1} parent=1 // pred_check_branch
      %25 = sbr.rel (0) target = $region21
    $region20: #{tpu_custom_call.1} parent=1 // pred_region
      _
    $region21: #{tpu_custom_call.1} parent=1 // pred_fallthru
      _
    // Predicated region
    $region22: #{tpu_custom_call.1} parent=1 // pred_check
      _
    $region23: #{tpu_custom_call.1} parent=1 // pred_check_branch
      %27 = sbr.rel (0) target = $region25
    $region24: #{tpu_custom_call.1} parent=1 // pred_region
      _
    $region25: #{tpu_custom_call.1} parent=1 // pred_fallthru
      _
    %p28 = scmp.eq.s32.totalorder 0, 0
    // Predicated region
    $region26: #{tpu_custom_call.1} parent=1 // pred_check
      %p29 = pneg %p28
    $region27: #{tpu_custom_call.1} parent=1 // pred_check_branch
      %31 = sbr.rel (%p29) target = $region29
    $region28: #{tpu_custom_call.1} parent=1 // pred_region
      %vm32 = vcmask 64512
      %33 = vst.msk [vmem:[#allocation2] sm:$0xff] %vm32, 0.0
      %vm34 = vcmask 7168
      %35 = vst.msk [vmem:[#allocation3] sm:$0xff] %vm34, 0.0
    $region29: #{tpu_custom_call.1} parent=1 // pred_fallthru
      _
    %v36 = vld [vmem:[%s0] sm:$0xff]
    %v37 = vld [vmem:[#allocation2] sm:$0xff]
    %38 = vmatprep.subr.mxu0 0.0
    %39 = vmatpush1.xpose.msra.mxu0 %v36
    %40 = vmatprep.subr.mxu0 0.0
    %41 = vmatpush1.xpose.msra.mxu0 0.0
    %42 = vmatprep.subr.mxu0 0.0
    %43 = vmatpush1.xpose.msra.mxu0 0.0
    %44 = vmatprep.subr.mxu0 0.0
    %45 = vmatpush1.xpose.msra.mxu0 0.0
    %46 = vmatprep.subr.mxu0 0.0
    %47 = vmatpush1.xpose.msra.mxu0 0.0
    %48 = vmatprep.subr.mxu0 0.0
    %49 = vmatpush1.xpose.msra.mxu0 0.0
    %50 = vmatprep.subr.mxu0 0.0
    %51 = vmatpush1.xpose.msra.mxu0 0.0
    %52 = vmatprep.subr.mxu0 0.0
    %53 = vmatpush1.xpose.msra.mxu0 0.0
    %54 = vmatprep.subr.mxu0 0.0
    %55 = vmatpush1.xpose.msra.mxu0 0.0
    %56 = vmatprep.subr.mxu0 0.0
    %57 = vmatpush1.xpose.msra.mxu0 0.0
    %58 = vmatprep.subr.mxu0 0.0
    %59 = vmatpush1.xpose.msra.mxu0 0.0
    %60 = vmatprep.subr.mxu0 0.0
    %61 = vmatpush1.xpose.msra.mxu0 0.0
    %62 = vmatprep.subr.mxu0 0.0
    %63 = vmatpush1.xpose.msra.mxu0 0.0
    %64 = vmatprep.subr.mxu0 0.0
    %65 = vmatpush1.xpose.msra.mxu0 0.0
    %66 = vmatprep.subr.mxu0 0.0
    %67 = vmatpush1.xpose.msra.mxu0 0.0
    %68 = vmatprep.subr.mxu0 0.0
    %69 = vmatpush1.xpose.msra.mxu0 0.0
    %70 = vmatprep.subr.mxu0 0.0
    %71 = vmatpush1.xpose.msra.mxu0 0.0
    %72 = vmatprep.subr.mxu0 0.0
    %73 = vmatpush1.xpose.msra.mxu0 0.0
    %74 = vmatprep.subr.mxu0 0.0
    %75 = vmatpush1.xpose.msra.mxu0 0.0
    %76 = vmatprep.subr.mxu0 0.0
    %77 = vmatpush1.xpose.msra.mxu0 0.0
    %78 = vmatprep.subr.mxu0 0.0
    %79 = vmatpush1.xpose.msra.mxu0 0.0
    %80 = vmatprep.subr.mxu0 0.0
    %81 = vmatpush1.xpose.msra.mxu0 0.0
    %82 = vmatprep.subr.mxu0 0.0
    %83 = vmatpush1.xpose.msra.mxu0 0.0
    %84 = vmatprep.subr.mxu0 0.0
    %85 = vmatpush1.xpose.msra.mxu0 0.0
    %86 = vmatprep.subr.mxu0 0.0
    %87 = vmatpush1.xpose.msra.mxu0 0.0
    %88 = vmatprep.subr.mxu0 0.0
    %89 = vmatpush1.xpose.msra.mxu0 0.0
    %90 = vmatprep.subr.mxu0 0.0
    %91 = vmatpush1.xpose.msra.mxu0 0.0
    %92 = vmatprep.subr.mxu0 0.0
    %93 = vmatpush1.xpose.msra.mxu0 0.0
    %94 = vmatprep.subr.mxu0 0.0
    %95 = vmatpush1.xpose.msra.mxu0 0.0
    %96 = vmatprep.subr.mxu0 0.0
    %97 = vmatpush1.xpose.msra.mxu0 0.0
    %98 = vmatprep.subr.mxu0 0.0
    %99 = vmatpush1.xpose.msra.mxu0 0.0
    %100 = vmatprep.subr.mxu0 0.0
    %101 = vmatpush1.xpose.msra.mxu0 0.0
    %102 = vmatprep.mubr.f32.mxu0 0.0
    %103 = vmatmul.mubr.f32.gmra.mrb[0].mxu0 %v36
    %v104 = vpop.f32.mrb[0].mxu0
    %v105 = vadd.f32 0.0, %v104
    %v106 = vpop.f32.mrb[0].mxu0
    %107 = vdwg.mxu0
    %v108 = vadd.f32 %v37, %v105
    %vm109 = vcmask 64512
    %110 = vst.msk [vmem:[#allocation2] sm:$0xff] %vm109, %v108
    %v111 = vld [vmem:[#allocation3] sm:$0xff]
    %v112 = vmul.f32 %v36, %v36
    %113 = vadd.xlane.f32.xlu0 %v112
    %v114 = vpop.xlane.xlu0 %113
    %v115 = vadd.f32 %v111, %v114
    %vm116 = vcmask 7168
    %117 = vst.msk [vmem:[#allocation3] sm:$0xff] %vm116, %v115
    // Predicated region
    $region30: #{tpu_custom_call.1} parent=1 // pred_check
      %p118 = pneg %p28
    $region31: #{tpu_custom_call.1} parent=1 // pred_check_branch
      %120 = sbr.rel (%p118) target = $region33
    $region32: #{tpu_custom_call.1} parent=1 // pred_region
      %v121 = vld [vmem:[%s1] sm:$0xff]
      %v122 = vld [vmem:[%s2] sm:$0x1]
      %v123 = vld [vmem:[%s3] sm:$0xff]
      %v124 = vld [vmem:[%s4] sm:$0x1]
      %v125 = vld [vmem:[%s5] sm:$0xff]
      %v126 = vld [vmem:[#allocation3] sm:$0xff]
      %127 = vxpose.xlu0.b32.start [1/16] %v126, 128
      %128 = vxpose.xlu0.b32.cont [2/16] 0.0, 128
      %129 = vxpose.xlu0.b32.cont [3/16] 0.0, 128
      %130 = vxpose.xlu0.b32.cont [4/16] 0.0, 128
      %131 = vxpose.xlu0.b32.cont [5/16] 0.0, 128
      %132 = vxpose.xlu0.b32.cont [6/16] 0.0, 128
      %133 = vxpose.xlu0.b32.cont [7/16] 0.0, 128
      %134 = vxpose.xlu0.b32.cont [8/16] 0.0, 128
      %135 = vxpose.xlu0.b32.cont [9/16] 0.0, 128
      %136 = vxpose.xlu0.b32.cont [10/16] 0.0, 128
      %137 = vxpose.xlu0.b32.cont [11/16] 0.0, 128
      %138 = vxpose.xlu0.b32.cont [12/16] 0.0, 128
      %139 = vxpose.xlu0.b32.cont [13/16] 0.0, 128
      %140 = vxpose.xlu0.b32.cont [14/16] 0.0, 128
      %141 = vxpose.xlu0.b32.cont [15/16] 0.0, 128
      %142 = vxpose.xlu0.b32.end [16/16] 0.0, 128
      %v143 = vpop.trf.xlu0
      %v144 = vpop.trf.xlu0
      %v145 = vpop.trf.xlu0
      %v146 = vpop.trf.xlu0
      %v147 = vpop.trf.xlu0
      %v148 = vpop.trf.xlu0
      %v149 = vpop.trf.xlu0
      %v150 = vpop.trf.xlu0
      %v151 = vpop.trf.xlu0
      %v152 = vpop.trf.xlu0
      %v153 = vpop.trf.xlu0
      %v154 = vpop.trf.xlu0
      %v155 = vpop.trf.xlu0
      %v156 = vpop.trf.xlu0
      %v157 = vpop.trf.xlu0
      %v158 = vpop.trf.xlu0
      %160 = vset.pattern.permute.xlu0 0
      %161 = vperm.xlu0 %160, %v126
      %v162 = vpop.permute.xlu0 %161
      %v164 = vlaneseq
      %v165 = vshrl.u32 %v164, 7
      %v166 = vsub.s32 0, %v165
      %v167 = vrot.slane %v143, %v166
      %v168 = vadd.f32 %v162, %v167
      %v169 = vld [vmem:[#allocation2] sm:$0xff]
      %v170 = vmul.f32 %v169, 2.0
      %v171 = vsub.f32 %v168, %v170
      %v172 = vmax.f32 %v171, 1e-10
      %v173 = vsel %vm109, %v172, 0.0
      %174 = vadd.xlane.f32.xlu0 %v173
      %v175 = vpop.xlane.xlu0 %174
      %v177 = vlaneseq
      %v178 = vshrl.u32 %v177, 7
      %v179 = vsub.s32 0, %v178
      %v180 = vrot.slane %v122, %v179
      %v182 = vmul.f32 %v172, %v180
      %v183 = vsel %vm109, %v182, 0.0
      %184 = vadd.xlane.f32.xlu0 %v183
      %v185 = vpop.xlane.xlu0 %184
      %187 = vset.pattern.permute.xlu0 0
      %188 = vperm.xlu0 %187, %v123
      %v189 = vpop.permute.xlu0 %188
      %v192 = vlaneseq
      %v193 = vshrl.u32 %v192, 7
      %v194 = vsub.s32 0, %v193
      %v195 = vrot.slane %v124, %v194
      %vm197 = vcmp.eq.f32.partialorder %v189, %v195
      %v198 = vsel %vm197, 1, 0
      %v199 = vcvt.s32.f32 %v198
      %v200 = vmul.f32 %v199, %v172
      %v201 = vsel %vm109, %v200, 0.0
      %202 = vadd.xlane.f32.xlu0 %v201
      %v203 = vpop.xlane.xlu0 %202
      %v204 = vsel %vm109, %v199, 0.0
      %205 = vadd.xlane.f32.xlu0 %v204
      %v206 = vpop.xlane.xlu0 %205
      %v207 = vsel %vm116, %v121, 0.0
      %208 = vadd.xlane.f32.xlu0 %v207
      %v209 = vpop.xlane.xlu0 %208
      %v210 = vrot.slane %v209, 4
      %v211 = vadd.f32 %v209, %v210
      %v212 = vrot.slane %v211, 2
      %v213 = vadd.f32 %v211, %v212
      %v214 = vrot.slane %v213, 1
      %v215 = vadd.f32 %v213, %v214
      %s216 = vtos %v215
      %v217 = vsub.f32 1.0, %v121
      %v218 = vmul.f32 %v121, %v185
      %v219 = vsub.f32 %v175, %v185
      %v220 = vmul.f32 %v217, %v219
      %v221 = vadd.f32 %v218, %v220
      %v222 = vstv %s216
      %v223 = vmul.f32 %v121, %v222
      %s224 = ssub.f32 8.0, %s216
      %v225 = vstv %s224
      %v226 = vmul.f32 %v217, %v225
      %v227 = vadd.f32 %v223, %v226
      %s228 = ssub.f32 %s224, 1.0
      %v229 = vstv %s228
      %v230 = vmul.f32 %v217, %v229
      %v231 = vsub.f32 %v227, %v206
      %v232 = vsub.f32 %v206, 1.0
      %v233 = vsub.f32 %v232, %v230
      %v234 = vsub.f32 8.0, %v227
      %v235 = vmul.f32 %v230, 10.0
      %v236 = vsub.f32 %v220, %v235
      %v237 = vmax.f32 %v236, 0.0
      %v238 = vsub.f32 %v221, %v203
      %v239 = vmul.f32 %v231, 10.0
      %v240 = vsub.f32 %v238, %v239
      %v241 = vmax.f32 %v240, 0.0
      %v242 = vsub.f32 %v203, %v220
      %v243 = vmul.f32 %v234, 20.0
      %v244 = vsub.f32 %v175, %v221
      %v245 = vsub.f32 %v243, %v244
      %v246 = vmax.f32 %v245, 0.0
      %v247 = vmax.f32 %v230, 1.0
      %v248 = vrcp.pop %v247
      %v249 = vmul.f32 %v237, %v248
      %v250 = vmax.f32 %v231, 1.0
      %v251 = vrcp.pop %v250
      %v252 = vmul.f32 %v241, %v251
      %v253 = vadd.f32 %v249, %v252
      %v254 = vmax.f32 %v233, 1.0
      %v255 = vrcp.pop %v254
      %v256 = vmul.f32 %v242, %v255
      %v257 = vadd.f32 %v253, %v256
      %v258 = vmax.f32 %v234, 1.0
      %v259 = vrcp.pop %v258
      %v260 = vmul.f32 %v246, %v259
      %v261 = vadd.f32 %v257, %v260
      %v262 = vsel %vm116, %v261, 0.0
      %263 = vadd.xlane.f32.xlu0 %v262
      %v264 = vpop.xlane.xlu0 %263
      %v265 = vrot.slane %v264, 4
      %v266 = vadd.f32 %v264, %v265
      %v267 = vrot.slane %v266, 2
      %v268 = vadd.f32 %v266, %v267
      %v269 = vrot.slane %v268, 1
      %v270 = vadd.f32 %v268, %v269
      %s271 = vtos %v270
      %v272 = vrcp.pop 8.0
      %s273 = vtos %v272
      %s274 = smul.f32 %s271, %s273
      %v275 = vlog2.pop %v125
      %v276 = vmul.f32 %v275, 0.6931472
      %v277 = vmax.f32 %v276, -100.0
      %v278 = vsub.f32 1.0, %v125
      %v279 = vlog2.pop %v278
      %v280 = vmul.f32 %v279, 0.6931472
      %v281 = vmax.f32 %v280, -100.0
      %v282 = vmul.f32 %v121, %v277
      %v283 = vmul.f32 %v217, %v281
      %v284 = vadd.f32 %v282, %v283
      %v285 = vsel %vm116, %v284, 0.0
      %286 = vadd.xlane.f32.xlu0 %v285
      %v287 = vpop.xlane.xlu0 %286
      %v288 = vrot.slane %v287, 4
      %v289 = vadd.f32 %v287, %v288
      %v290 = vrot.slane %v289, 2
      %v291 = vadd.f32 %v289, %v290
      %v292 = vrot.slane %v291, 1
      %v293 = vadd.f32 %v291, %v292
      %s294 = vtos %v293
      %s295 = ssub.f32 0.0, %s294
      %v296 = vrcp.pop 8.0
      %s297 = vtos %v296
      %s298 = smul.f32 %s295, %s297
      %s299 = smul.f32 %s298, 100.0
      %s300 = sadd.f32 %s274, %s299
      %s301 = scalar_lea.smem [#allocation4], 0
      %302 = sst [smem:[%s301]] %s300
      %s303 = scalar_lea.smem [#allocation6], 0
      %304 = sst [smem:[%s303]] %s274
      %s305 = scalar_lea.smem [#allocation8], 0
      %306 = sst [smem:[%s305]] %s298
    $region33: #{tpu_custom_call.1} parent=1 // pred_fallthru
      _
    // Predicated region
    $region34: #{tpu_custom_call.1} parent=1 // pred_check
      _
    $region35: #{tpu_custom_call.1} parent=1 // pred_check_branch
      %308 = sbr.rel (0) target = $region37
    $region36: #{tpu_custom_call.1} parent=1 // pred_region
      %s310 = ssub.s32 16, 16
      %311 = vsyncadd [#allocation5], %s310
      %314 = dma.smem_to_hbm [#allocation4], 16, %s6, [#allocation5]
    $region37: #{tpu_custom_call.1} parent=1 // pred_fallthru
      _
    // Predicated region
    $region38: #{tpu_custom_call.1} parent=1 // pred_check
      _
    $region39: #{tpu_custom_call.1} parent=1 // pred_check_branch
      %316 = sbr.rel (0) target = $region41
    $region40: #{tpu_custom_call.1} parent=1 // pred_region
      %s318 = ssub.s32 16, 16
      %319 = vsyncadd [#allocation7], %s318
      %322 = dma.smem_to_hbm [#allocation6], 16, %s7, [#allocation7]
    $region41: #{tpu_custom_call.1} parent=1 // pred_fallthru
      _
    // Predicated region
    $region42: #{tpu_custom_call.1} parent=1 // pred_check
      _
    $region43: #{tpu_custom_call.1} parent=1 // pred_check_branch
      %324 = sbr.rel (0) target = $region45
    $region44: #{tpu_custom_call.1} parent=1 // pred_region
      %s326 = ssub.s32 16, 16
      %327 = vsyncadd [#allocation7], %s326
      %330 = dma.smem_to_hbm [#allocation8], 16, %s8, [#allocation7]
    $region45: #{tpu_custom_call.1} parent=1 // pred_fallthru
      _
    // Predicated region
    $region46: #{tpu_custom_call.1} parent=1 // pred_check
      _
    $region47: #{tpu_custom_call.1} parent=1 // pred_check_branch
      %332 = sbr.rel (0) target = $region49
    $region48: #{tpu_custom_call.1} parent=1 // pred_region
      %333 = dma.done [#allocation5], 16
    $region49: #{tpu_custom_call.1} parent=1 // pred_fallthru
      _
    // Predicated region
    $region50: #{tpu_custom_call.1} parent=1 // pred_check
      _
    $region51: #{tpu_custom_call.1} parent=1 // pred_check_branch
      %335 = sbr.rel (0) target = $region53
    $region52: #{tpu_custom_call.1} parent=1 // pred_region
      %336 = dma.done [#allocation7], 16
    $region53: #{tpu_custom_call.1} parent=1 // pred_fallthru
      _
    // Predicated region
    $region54: #{tpu_custom_call.1} parent=1 // pred_check
      _
    $region55: #{tpu_custom_call.1} parent=1 // pred_check_branch
      %338 = sbr.rel (0) target = $region57
    $region56: #{tpu_custom_call.1} parent=1 // pred_region
      %339 = dma.done [#allocation7], 16
    $region57: #{tpu_custom_call.1} parent=1 // pred_fallthru
      _
    %340 = sfence
    %341 = vsyncpa [#allocation5], 1
    %342 = vsyncpa [#allocation7], 1

</llo_original>
